<compile_context>
chip_gen: v6e
topology: v6e:2x2x1
jax: 0.10.0
libtpu: 0.0.40
codegen_flags: <defaults>
</compile_context>

<pallas_src>
import functools

import jax
import jax.numpy as jnp
from jax.experimental import pallas as pl
from jax.experimental.pallas import tpu as pltpu


# --------------------------------------------------------------------------- kernels
def _conv_stats_kernel(x_ref, w_ref, y_ref, sum_ref, ssq_ref):
    """One output tile: y = W @ x (MXU), plus per-channel sum / sum-sq partials."""
    # (Cout, K) @ (K, TS) -> (Cout, TS): spatial sits in the 128-lane dimension.
    y = jnp.dot(w_ref[...], x_ref[0], preferred_element_type=jnp.float32)
    y_ref[0] = y
    # Per-tile partial batch statistics (combined by a tiny XLA reduction outside).
    sum_ref[0, 0] = jnp.sum(y, axis=1, keepdims=True)
    ssq_ref[0, 0] = jnp.sum(y * y, axis=1, keepdims=True)


def _bn_relu_kernel(scale_ref, shift_ref, y_ref, o_ref):
    """Elementwise: out = relu(y * scale + shift); written in place (aliased)."""
    o_ref[0] = jnp.maximum(y_ref[0] * scale_ref[...] + shift_ref[...], 0.0)


# ------------------------------------------------------------------ tiling heuristics
def _vmem_capacity_bytes():
    try:
        cap = getattr(pltpu.get_tpu_info(), "vmem_capacity_bytes", None)
        if cap:
            return int(cap)
    except Exception:
        pass
    return 64 << 20  # conservative (v7x-sized) fallback


def _pick_spatial_tile(S, K, Cout, budget_bytes, x_itemsize):
    """Largest lane-dense TS (multiple of 128 dividing S) whose double-buffered
    x + y columns fit the per-step budget, with a >=512-lane floor when possible."""
    if S % 128 != 0:
        return S  # small / pre-screened case: one full (internally padded) block
    bytes_per_lane = 2 * K * x_itemsize + 2 * Cout * 4
    max_ts = (budget_bytes // bytes_per_lane) // 128 * 128
    floor = 512 if S % 512 == 0 else 128       # review #4: amortize per-step overhead
    max_ts = max(max_ts, floor)
    ts = min(S, max_ts)
    while S % ts != 0:
        ts -= 128
    return ts


# ----------------------------------------------------------------------------- forward
@functools.partial(jax.jit, static_argnames=("eps", "compute_dtype"))
def _forward(x, weight, gamma, beta, *, eps, compute_dtype):
    N, Cin, D, H, W = x.shape
    Cout = weight.shape[0]
    Do, Ho, Wo = D // 2, H // 2, W // 2
    S = Do * Ho * Wo                    # output spatial positions -> lane dimension
    K = Cin * 8                         # taps per output voxel (cin, kd, kh, kw)
    itemsize = jnp.dtype(compute_dtype).itemsize

    # Tap gather (im2col), taps leading / spatial trailing: (N, K, S).
    # TODO(synk): still one XLA HBM round trip of x -- see module docstring.
    xT = x.reshape(N, Cin, Do, 2, Ho, 2, Wo, 2)
    xT = xT.transpose(0, 1, 3, 5, 7, 2, 4, 6).reshape(N, K, S)
    xT = xT.astype(compute_dtype)
    w2 = weight.reshape(Cout, K).astype(compute_dtype)

    # Generation-aware budgets (review #3/#4).
    vmem_cap = _vmem_capacity_bytes()
    big_vmem = vmem_cap >= (96 << 20)            # v5e / v6e (128 MiB) vs v7x (64 MiB)
    budget = (20 << 20) if big_vmem else (7 << 20)

    # Non-128-multiple spatial extent: zero-pad to a lane-dense multiple of 128 unless
    # a single full block comfortably fits the budget (review #6).  Padded columns are
    # all-zero, so they contribute exactly 0 to the batch-stat sums.
    if S % 128 != 0 and 2 * (K * itemsize + Cout * 4) * S > budget:
        S_pad = pl.cdiv(S, 128) * 128
        xT = jnp.pad(xT, ((0, 0), (0, 0), (0, S_pad - S)))
    else:
        S_pad = S

    TS = _pick_spatial_tile(S_pad, K, Cout, budget, itemsize)
    n_s = S_pad // TS
    grid = (N, n_s)

    blk_bytes = (2 * K * TS * itemsize        # double-buffered x blocks
                 + 2 * Cout * TS * 4          # double-buffered y blocks
                 + Cout * K * itemsize        # resident weights
                 + 4 * 8 * 256)               # stat blocks (padded, tiny)
    vmem_limit = int(min(max(2 * blk_bytes, 16 << 20), int(0.45 * vmem_cap)))
    vmem_limit = max(vmem_limit, int(1.3 * blk_bytes))

    # ---- call 1: conv matmul + per-tile channel statistics (all-parallel grid) ----
    y, psum, pssq = pl.pallas_call(
        _conv_stats_kernel,
        out_shape=(
            jax.ShapeDtypeStruct((N, Cout, S_pad), jnp.float32),
            jax.ShapeDtypeStruct((N, n_s, Cout, 1), jnp.float32),
            jax.ShapeDtypeStruct((N, n_s, Cout, 1), jnp.float32),
        ),
        grid_spec=pltpu.PrefetchScalarGridSpec(
            num_scalar_prefetch=0,
            grid=grid,
            in_specs=[
                pl.BlockSpec((1, K, TS), lambda n, s: (n, 0, s)),
                pl.BlockSpec((Cout, K), lambda n, s: (0, 0)),
            ],
            out_specs=[
                pl.BlockSpec((1, Cout, TS), lambda n, s: (n, 0, s)),
                pl.BlockSpec((1, 1, Cout, 1), lambda n, s: (n, s, 0, 0)),
                pl.BlockSpec((1, 1, Cout, 1), lambda n, s: (n, s, 0, 0)),
            ],
        ),
        compiler_params=pltpu.CompilerParams(
            dimension_semantics=("parallel", "parallel"),
            vmem_limit_bytes=vmem_limit,
        ),
    )(xT, w2)

    # ---- fold BN (training batch stats) into one scale/shift per channel ----------
    # TODO(synk): single-pass E[y^2]-E[y]^2 can lose precision for strongly
    # off-center y; switch to a centered second pass if that ever matters.
    inv_m = 1.0 / float(N * S)                     # true count (padding excluded)
    mean = jnp.sum(psum, axis=(0, 1)) * inv_m      # (Cout, 1)
    var = jnp.maximum(jnp.sum(pssq, axis=(0, 1)) * inv_m - mean * mean, 0.0)
    scale = gamma.reshape(Cout, 1).astype(jnp.float32) * jax.lax.rsqrt(var + eps)
    shift = beta.reshape(Cout, 1).astype(jnp.float32) - mean * scale

    # ---- call 2: in-place FMA + ReLU over y (aliased output, all-parallel grid) ----
    out = pl.pallas_call(
        _bn_relu_kernel,
        out_shape=jax.ShapeDtypeStruct((N, Cout, S_pad), jnp.float32),
        grid_spec=pltpu.PrefetchScalarGridSpec(
            num_scalar_prefetch=0,
            grid=grid,
            in_specs=[
                pl.BlockSpec((Cout, 1), lambda n, s: (0, 0)),
                pl.BlockSpec((Cout, 1), lambda n, s: (0, 0)),
                pl.BlockSpec((1, Cout, TS), lambda n, s: (n, 0, s)),
            ],
            out_specs=pl.BlockSpec((1, Cout, TS), lambda n, s: (n, 0, s)),
        ),
        input_output_aliases={2: 0},   # write the result over the y buffer
        compiler_params=pltpu.CompilerParams(
            dimension_semantics=("parallel", "parallel"),
            vmem_limit_bytes=vmem_limit,
        ),
    )(scale, shift, y)

    if S_pad != S:
        out = out[:, :, :S]
    # (N, Cout, S) -> NCDHW is a free reshape (no transpose).
    return out.reshape(N, Cout, Do, Ho, Wo)


def downsample_conv_blk(x, weight, bias, gamma, beta, eps=1e-5,
                        compute_dtype=jnp.float32):
    """x: (N, Cin, D, H, W); weight: (Cout, Cin, 2, 2, 2); bias/gamma/beta: (Cout,).

    Forward of Conv3d(k=2, s=2, p=0) -> BatchNorm3d (training batch stats) -> ReLU.
    The conv bias is intentionally not applied: a per-channel bias followed
    immediately by batch-stat BatchNorm cancels exactly (training mode only; would
    NOT hold with running stats).  compute_dtype=jnp.bfloat16 halves the dominant
    x HBM read and doubles MXU rate at the cost of ~1e-2 relative error.
    """
    del bias
    return _forward(x, weight, gamma, beta,
                    eps=float(eps), compute_dtype=jnp.dtype(compute_dtype))


# --------------------------------------------------------------------------- reference
def _reference(x, weight, bias, gamma, beta, eps=1e-5):
    y = jax.lax.conv_general_dilated(
        x, weight, window_strides=(2, 2, 2), padding="VALID",
        dimension_numbers=("NCDHW", "OIDHW", "NCDHW"))
    y = y + bias.reshape(1, -1, 1, 1, 1)
    mean = jnp.mean(y, axis=(0, 2, 3, 4), keepdims=True)
    var = jnp.var(y, axis=(0, 2, 3, 4), keepdims=True)
    y = (y - mean) * jax.lax.rsqrt(var + eps)
    y = y * gamma.reshape(1, -1, 1, 1, 1) + beta.reshape(1, -1, 1, 1, 1)
    return jnp.maximum(y, 0.0)


if __name__ == "__main__":
    key = jax.random.PRNGKey(0)
    kx, kw, kb = jax.random.split(key, 3)

    N, Cin, Cout, D, H, W = 2, 4, 8, 16, 16, 16
    x = jax.random.normal(kx, (N, Cin, D, H, W), dtype=jnp.float32)
    weight = 0.1 * jax.random.normal(kw, (Cout, Cin, 2, 2, 2), dtype=jnp.float32)
    bias = 0.1 * jax.random.normal(kb, (Cout,), dtype=jnp.float32)
    gamma = jnp.ones((Cout,), dtype=jnp.float32)   # PyTorch BatchNorm3d default init
    beta = jnp.zeros((Cout,), dtype=jnp.float32)

    out = downsample_conv_blk(x, weight, bias, gamma, beta)
    out = jax.block_until_ready(out)

    ref = _reference(x, weight, bias, gamma, beta)
    assert out.shape == (N, Cout, D // 2, H // 2, W // 2), out.shape
    err = float(jnp.max(jnp.abs(out - ref)))
    assert jnp.allclose(out, ref, atol=1e-4, rtol=1e-4), err

    print("KERNEL_OK")
</pallas_src>

<mosaic_0001>
module attributes {stable_mosaic.version = 11 : i64} {
  func.func @_conv_stats_kernel(%arg0: i32, %arg1: i32, %arg2: memref<1x32x512xf32, #tpu.memory_space<vmem>>, %arg3: memref<8x32xf32, #tpu.memory_space<vmem>>, %arg4: memref<1x8x512xf32, #tpu.memory_space<vmem>>, %arg5: memref<1x1x8x1xf32, #tpu.memory_space<vmem>>, %arg6: memref<1x1x8x1xf32, #tpu.memory_space<vmem>>) attributes {dimension_semantics = [#tpu.dimension_semantics<parallel>, #tpu.dimension_semantics<parallel>], iteration_bounds = array<i64: 2, 1>, scalar_prefetch = 0 : i64, scratch_operands = 0 : i64, tpu.core_type = #tpu.core_type<tc>, window_params = [{transform_indices = @transform_0, window_bounds = array<i64: 1, 32, 512>}, {pipeline_mode = #tpu.pipeline_mode<synchronous>, transform_indices = @transform_1, window_bounds = array<i64: 8, 32>}, {transform_indices = @transform_2, window_bounds = array<i64: 1, 8, 512>}, {transform_indices = @transform_3, window_bounds = array<i64: 1, 1, 8, 1>}, {transform_indices = @transform_4, window_bounds = array<i64: 1, 1, 8, 1>}]} {
    %c0 = arith.constant 0 : index
    %c0_0 = arith.constant 0 : index
    %0 = vector.load %arg3[%c0, %c0_0] : memref<8x32xf32, #tpu.memory_space<vmem>>, vector<8x32xf32>
    %c0_1 = arith.constant 0 : index
    %c0_2 = arith.constant 0 : index
    %c0_3 = arith.constant 0 : index
    %1 = vector.load %arg2[%c0_1, %c0_2, %c0_3] : memref<1x32x512xf32, #tpu.memory_space<vmem>>, vector<1x32x512xf32>
    %2 = vector.shape_cast %1 : vector<1x32x512xf32> to vector<32x512xf32>
    %cst = arith.constant dense<0.000000e+00> : vector<8x512xf32>
    %3 = tpu.matmul %0, %2, %cst {dimension_numbers = #tpu.dot_dimension_numbers<[1], [0], [0], [1], [0, 0, 1, 1], [], []>} : vector<8x32xf32>, vector<32x512xf32>, vector<8x512xf32> -> vector<8x512xf32>
    %c0_4 = arith.constant 0 : index
    %c0_5 = arith.constant 0 : index
    %c0_6 = arith.constant 0 : index
    %4 = vector.load %arg4[%c0_4, %c0_5, %c0_6] : memref<1x8x512xf32, #tpu.memory_space<vmem>>, vector<1x8x512xf32>
    %5 = vector.shape_cast %4 : vector<1x8x512xf32> to vector<8x512xf32>
    %6 = vector.shape_cast %3 : vector<8x512xf32> to vector<1x8x512xf32>
    tpu.vector_store %arg4[%c0_4, %c0_5, %c0_6], %6 {strides = array<i32>} : memref<1x8x512xf32, #tpu.memory_space<vmem>>, vector<1x8x512xf32>,
    %cst_7 = arith.constant dense<0.000000e+00> : vector<8xf32>
    %7 = vector.multi_reduction <add>, %3, %cst_7 [1] : vector<8x512xf32> to vector<8xf32>
    %8 = vector.shape_cast %7 : vector<8xf32> to vector<8x1xf32>
    %c0_8 = arith.constant 0 : index
    %c0_9 = arith.constant 0 : index
    %c0_10 = arith.constant 0 : index
    %c0_11 = arith.constant 0 : index
    %9 = vector.load %arg5[%c0_8, %c0_9, %c0_10, %c0_11] : memref<1x1x8x1xf32, #tpu.memory_space<vmem>>, vector<1x1x8x1xf32>
    %10 = vector.shape_cast %9 : vector<1x1x8x1xf32> to vector<8x1xf32>
    %11 = vector.shape_cast %8 : vector<8x1xf32> to vector<1x1x8x1xf32>
    tpu.vector_store %arg5[%c0_8, %c0_9, %c0_10, %c0_11], %11 {strides = array<i32>} : memref<1x1x8x1xf32, #tpu.memory_space<vmem>>, vector<1x1x8x1xf32>,
    %12 = arith.mulf %3, %3 : vector<8x512xf32>
    %cst_12 = arith.constant dense<0.000000e+00> : vector<8xf32>
    %13 = vector.multi_reduction <add>, %12, %cst_12 [1] : vector<8x512xf32> to vector<8xf32>
    %14 = vector.shape_cast %13 : vector<8xf32> to vector<8x1xf32>
    %c0_13 = arith.constant 0 : index
    %c0_14 = arith.constant 0 : index
    %c0_15 = arith.constant 0 : index
    %c0_16 = arith.constant 0 : index
    %15 = vector.load %arg6[%c0_13, %c0_14, %c0_15, %c0_16] : memref<1x1x8x1xf32, #tpu.memory_space<vmem>>, vector<1x1x8x1xf32>
    %16 = vector.shape_cast %15 : vector<1x1x8x1xf32> to vector<8x1xf32>
    %17 = vector.shape_cast %14 : vector<8x1xf32> to vector<1x1x8x1xf32>
    tpu.vector_store %arg6[%c0_13, %c0_14, %c0_15, %c0_16], %17 {strides = array<i32>} : memref<1x1x8x1xf32, #tpu.memory_space<vmem>>, vector<1x1x8x1xf32>,
    return
  }
  func.func @transform_0(%arg0: i32, %arg1: i32) -> (i32, i32, i32) {
    %c0_i32 = arith.constant 0 : i32
    %c0_i32_0 = arith.constant 0 : i32
    return %arg0, %c0_i32, %arg1 : i32, i32, i32
  }
  func.func @transform_1(%arg0: i32, %arg1: i32) -> (i32, i32) {
    %c0_i32 = arith.constant 0 : i32
    %c0_i32_0 = arith.constant 0 : i32
    %c0_i32_1 = arith.constant 0 : i32
    return %c0_i32, %c0_i32_0 : i32, i32
  }
  func.func @transform_2(%arg0: i32, %arg1: i32) -> (i32, i32, i32) {
    %c0_i32 = arith.constant 0 : i32
    %c0_i32_0 = arith.constant 0 : i32
    return %arg0, %c0_i32, %arg1 : i32, i32, i32
  }
  func.func @transform_3(%arg0: i32, %arg1: i32) -> (i32, i32, i32, i32) {
    %c0_i32 = arith.constant 0 : i32
    %c0_i32_0 = arith.constant 0 : i32
    %c0_i32_1 = arith.constant 0 : i32
    return %arg0, %arg1, %c0_i32, %c0_i32_0 : i32, i32, i32, i32
  }
  func.func @transform_4(%arg0: i32, %arg1: i32) -> (i32, i32, i32, i32) {
    %c0_i32 = arith.constant 0 : i32
    %c0_i32_0 = arith.constant 0 : i32
    %c0_i32_1 = arith.constant 0 : i32
    return %arg0, %arg1, %c0_i32, %c0_i32_0 : i32, i32, i32, i32
  }
}

module attributes {stable_mosaic.version = 11 : i64} {
  func.func @_bn_relu_kernel(%arg0: i32, %arg1: i32, %arg2: memref<8x1xf32, #tpu.memory_space<vmem>>, %arg3: memref<8x1xf32, #tpu.memory_space<vmem>>, %arg4: memref<1x8x512xf32, #tpu.memory_space<vmem>>, %arg5: memref<1x8x512xf32, #tpu.memory_space<vmem>>) attributes {dimension_semantics = [#tpu.dimension_semantics<parallel>, #tpu.dimension_semantics<parallel>], iteration_bounds = array<i64: 2, 1>, scalar_prefetch = 0 : i64, scratch_operands = 0 : i64, tpu.core_type = #tpu.core_type<tc>, window_params = [{pipeline_mode = #tpu.pipeline_mode<synchronous>, transform_indices = @transform_0, window_bounds = array<i64: 8, 1>}, {pipeline_mode = #tpu.pipeline_mode<synchronous>, transform_indices = @transform_1, window_bounds = array<i64: 8, 1>}, {transform_indices = @transform_2, window_bounds = array<i64: 1, 8, 512>}, {transform_indices = @transform_3, window_bounds = array<i64: 1, 8, 512>}]} {
    %c0 = arith.constant 0 : index
    %c0_0 = arith.constant 0 : index
    %c0_1 = arith.constant 0 : index
    %0 = vector.load %arg4[%c0, %c0_0, %c0_1] : memref<1x8x512xf32, #tpu.memory_space<vmem>>, vector<1x8x512xf32>
    %1 = vector.shape_cast %0 : vector<1x8x512xf32> to vector<8x512xf32>
    %c0_2 = arith.constant 0 : index
    %c0_3 = arith.constant 0 : index
    %2 = vector.load %arg2[%c0_2, %c0_3] : memref<8x1xf32, #tpu.memory_space<vmem>>, vector<8x1xf32>
    %3 = vector.broadcast %2 : vector<8x1xf32> to vector<8x512xf32>
    %4 = arith.mulf %1, %3 : vector<8x512xf32>
    %c0_4 = arith.constant 0 : index
    %c0_5 = arith.constant 0 : index
    %5 = vector.load %arg3[%c0_4, %c0_5] : memref<8x1xf32, #tpu.memory_space<vmem>>, vector<8x1xf32>
    %6 = vector.broadcast %5 : vector<8x1xf32> to vector<8x512xf32>
    %7 = arith.addf %4, %6 : vector<8x512xf32>
    %cst = arith.constant 0.000000e+00 : f32
    %8 = vector.broadcast %cst : f32 to vector<8x512xf32>
    %9 = arith.maximumf %7, %8 : vector<8x512xf32>
    %c0_6 = arith.constant 0 : index
    %c0_7 = arith.constant 0 : index
    %c0_8 = arith.constant 0 : index
    %10 = vector.load %arg5[%c0_6, %c0_7, %c0_8] : memref<1x8x512xf32, #tpu.memory_space<vmem>>, vector<1x8x512xf32>
    %11 = vector.shape_cast %10 : vector<1x8x512xf32> to vector<8x512xf32>
    %12 = vector.shape_cast %9 : vector<8x512xf32> to vector<1x8x512xf32>
    tpu.vector_store %arg5[%c0_6, %c0_7, %c0_8], %12 {strides = array<i32>} : memref<1x8x512xf32, #tpu.memory_space<vmem>>, vector<1x8x512xf32>,
    return
  }
  func.func @transform_0(%arg0: i32, %arg1: i32) -> (i32, i32) {
    %c0_i32 = arith.constant 0 : i32
    %c0_i32_0 = arith.constant 0 : i32
    %c0_i32_1 = arith.constant 0 : i32
    return %c0_i32, %c0_i32_0 : i32, i32
  }
  func.func @transform_1(%arg0: i32, %arg1: i32) -> (i32, i32) {
    %c0_i32 = arith.constant 0 : i32
    %c0_i32_0 = arith.constant 0 : i32
    %c0_i32_1 = arith.constant 0 : i32
    return %c0_i32, %c0_i32_0 : i32, i32
  }
  func.func @transform_2(%arg0: i32, %arg1: i32) -> (i32, i32, i32) {
    %c0_i32 = arith.constant 0 : i32
    %c0_i32_0 = arith.constant 0 : i32
    return %arg0, %c0_i32, %arg1 : i32, i32, i32
  }
  func.func @transform_3(%arg0: i32, %arg1: i32) -> (i32, i32, i32) {
    %c0_i32 = arith.constant 0 : i32
    %c0_i32_0 = arith.constant 0 : i32
    return %arg0, %c0_i32, %arg1 : i32, i32, i32
  }
}

</mosaic_0001>

<llo_original>
// kernel: _forward.2
$region0: #{_forward.2}
  #allocation0 [shape = 'u32[]', space=smem, size = 0x4, offset = 0x4, fixed_abs, tag = 'smem constant byte address 0x4 - core index']
  #allocation1 [shape = 'u32[144,128]{1,0:T(1,128)}', space=vmem, size = 0x12000, scoped, tag = 'internal scratch']
  %s0 = inlined_call_operand.vmem [shape: f32[2,32,512], index: 0, kind: input, shape index: {}]
  %s1 = inlined_call_operand.vmem [shape: f32[8,32], index: 1, kind: input, shape index: {}]
  %s2 = inlined_call_operand.vmem [shape: f32[2,8,512], index: 2, kind: output, shape index: {0}]
  %s3 = inlined_call_operand.vmem [shape: f32[2,1,8,1], index: 3, kind: output, shape index: {1}]
  %s4 = inlined_call_operand.vmem [shape: f32[2,1,8,1], index: 4, kind: output, shape index: {2}]
  %5 = xla_tuple %s2, %s3, %s4
  %s6 = sld [smem:[#allocation0]]
  $region57: #{_forward.2} parent=0
    _
  %s8 = ssub.s32 1, %s6
  %s9 = scalar_select 0, %s8, %s6
  loop: start=0, step=1, limit=4
  $region2: #{_forward.2} parent=0 // loop_pre_header
    _
  $region3: #{_forward.2} parent=0 // loop_header
    %s11 = sphi 0, %s15
    %p12 = scmp.ge.s32.totalorder %s11, 4
    %s18 = sphi 0, %s30
    %s19 = sphi 0, %s26
    %s20 = sphi 0, %s18
    %s21 = sphi 0, %s19
    %s22 = sphi 0, %s20
    %s23 = sphi 0, %s21
    %s35 = sphi 0, %s37
    %s38 = sphi 0, %s35
    %s39 = sphi 0, %s38
    %s55 = sphi 0, %s39
    %s59 = sphi 0, %s59
    %s61 = sphi 0, %s59
    %s62 = sphi 0, %s61
    %s76 = sphi 0, %s62
    %s84 = sphi 0, %s86
    %s87 = sphi 0, %s84
    %s88 = sphi 0, %s87
    %s104 = sphi 0, %s88
    %s112 = sphi 0, %s114
    %s115 = sphi 0, %s112
    %s116 = sphi 0, %s115
    %s132 = sphi 0, %s116
    %s140 = sphi 0, %s142
    %s143 = sphi 0, %s140
    %s144 = sphi 0, %s143
    %s160 = sphi 0, %s144
  $region4: #{_forward.2} parent=0 // loop_header_branch
    %14 = sbr.rel (%p12) target = $region8
  $region5: #{_forward.2} parent=0 // loop_body
    %s16 = ssub.s32 %s11, 1
    %s17 = ssub.s32 %s11, 2
    %s24 = sadd.s32 1, %s19
    %p25 = scmp.ge.s32.totalorder %s24, 1
    %s26 = scalar_select %p25, 0, %s24
    %s27 = sadd.s32 1, %s18
    %s28 = scalar_select %p25, %s27, %s18
    %p29 = scmp.ge.s32.totalorder %s28, 2
    %s30 = scalar_select %p29, 0, %s28
    %s31 = ssub.s32 %s18, %s30
    %s32 = ssub.s32 %s19, %s26
    %s33 = sor.u32 %s31, %s32
    %p34 = scmp.eq.s32.totalorder %s33, 0
    %s36 = sadd.s32 %s35, 1
    %s37 = scalar_select %p34, %s35, %s36
    %p40 = pneg %p34
    %p41 = scmp.eq.s32.totalorder %s11, 1
    %p42 = por %p40, %p41
    %p43 = scmp.ne.s32.totalorder %s35, %s38
    %p44 = scmp.eq.s32.totalorder %s11, 0
    %p45 = por %p43, %p44
    %p46 = scmp.ne.s32.totalorder %s35, %s38
    %p47 = scmp.eq.s32.totalorder %s16, 1
    %p48 = por %p46, %p47
    %p49 = scmp.ne.s32.totalorder %s38, %s39
    %p50 = scmp.eq.s32.totalorder %s16, 0
    %p51 = por %p49, %p50
    %p52 = scmp.ne.s32.totalorder %s38, %s39
    %p53 = scmp.eq.s32.totalorder %s17, 1
    %p54 = por %p52, %p53
    %p56 = scmp.ne.s32.totalorder %s39, %s55
    %p57 = scmp.eq.s32.totalorder %s17, 0
    %p58 = por %p56, %p57
    %s60 = sadd.s32 %s59, 1
    %p63 = scmp.eq.s32.totalorder %s11, 1
    %p64 = scmp.ne.s32.totalorder %s59, %s61
    %p65 = scmp.eq.s32.totalorder %s11, 0
    %p66 = por %p64, %p65
    %p67 = scmp.ne.s32.totalorder %s59, %s61
    %p68 = scmp.eq.s32.totalorder %s16, 1
    %p69 = por %p67, %p68
    %p70 = scmp.ne.s32.totalorder %s61, %s62
    %p71 = scmp.eq.s32.totalorder %s16, 0
    %p72 = por %p70, %p71
    %p73 = scmp.ne.s32.totalorder %s61, %s62
    %p74 = scmp.eq.s32.totalorder %s17, 1
    %p75 = por %p73, %p74
    %p77 = scmp.ne.s32.totalorder %s62, %s76
    %p78 = scmp.eq.s32.totalorder %s17, 0
    %p79 = por %p77, %p78
    %s80 = ssub.s32 %s18, %s30
    %s81 = ssub.s32 %s19, %s26
    %s82 = sor.u32 %s80, %s81
    %p83 = scmp.eq.s32.totalorder %s82, 0
    %s85 = sadd.s32 %s84, 1
    %s86 = scalar_select %p83, %s84, %s85
    %p89 = pneg %p83
    %p90 = scmp.eq.s32.totalorder %s11, 1
    %p91 = por %p89, %p90
    %p92 = scmp.ne.s32.totalorder %s84, %s87
    %p93 = scmp.eq.s32.totalorder %s11, 0
    %p94 = por %p92, %p93
    %p95 = scmp.ne.s32.totalorder %s84, %s87
    %p96 = scmp.eq.s32.totalorder %s16, 1
    %p97 = por %p95, %p96
    %p98 = scmp.ne.s32.totalorder %s87, %s88
    %p99 = scmp.eq.s32.totalorder %s16, 0
    %p100 = por %p98, %p99
    %p101 = scmp.ne.s32.totalorder %s87, %s88
    %p102 = scmp.eq.s32.totalorder %s17, 1
    %p103 = por %p101, %p102
    %p105 = scmp.ne.s32.totalorder %s88, %s104
    %p106 = scmp.eq.s32.totalorder %s17, 0
    %p107 = por %p105, %p106
    %s108 = ssub.s32 %s18, %s30
    %s109 = ssub.s32 %s19, %s26
    %s110 = sor.u32 %s108, %s109
    %p111 = scmp.eq.s32.totalorder %s110, 0
    %s113 = sadd.s32 %s112, 1
    %s114 = scalar_select %p111, %s112, %s113
    %p117 = pneg %p111
    %p118 = scmp.eq.s32.totalorder %s11, 1
    %p119 = por %p117, %p118
    %p120 = scmp.ne.s32.totalorder %s112, %s115
    %p121 = scmp.eq.s32.totalorder %s11, 0
    %p122 = por %p120, %p121
    %p123 = scmp.ne.s32.totalorder %s112, %s115
    %p124 = scmp.eq.s32.totalorder %s16, 1
    %p125 = por %p123, %p124
    %p126 = scmp.ne.s32.totalorder %s115, %s116
    %p127 = scmp.eq.s32.totalorder %s16, 0
    %p128 = por %p126, %p127
    %p129 = scmp.ne.s32.totalorder %s115, %s116
    %p130 = scmp.eq.s32.totalorder %s17, 1
    %p131 = por %p129, %p130
    %p133 = scmp.ne.s32.totalorder %s116, %s132
    %p134 = scmp.eq.s32.totalorder %s17, 0
    %p135 = por %p133, %p134
    %s136 = ssub.s32 %s18, %s30
    %s137 = ssub.s32 %s19, %s26
    %s138 = sor.u32 %s136, %s137
    %p139 = scmp.eq.s32.totalorder %s138, 0
    %s141 = sadd.s32 %s140, 1
    %s142 = scalar_select %p139, %s140, %s141
    %p145 = pneg %p139
    %p146 = scmp.eq.s32.totalorder %s11, 1
    %p147 = por %p145, %p146
    %p148 = scmp.ne.s32.totalorder %s140, %s143
    %p149 = scmp.eq.s32.totalorder %s11, 0
    %p150 = por %p148, %p149
    %p151 = scmp.ne.s32.totalorder %s140, %s143
    %p152 = scmp.eq.s32.totalorder %s16, 1
    %p153 = por %p151, %p152
    %p154 = scmp.ne.s32.totalorder %s143, %s144
    %p155 = scmp.eq.s32.totalorder %s16, 0
    %p156 = por %p154, %p155
    %p157 = scmp.ne.s32.totalorder %s143, %s144
    %p158 = scmp.eq.s32.totalorder %s17, 1
    %p159 = por %p157, %p158
    %p161 = scmp.ne.s32.totalorder %s144, %s160
    %p162 = scmp.eq.s32.totalorder %s17, 0
    %p163 = por %p161, %p162
    %p164 = scmp.le.s32.totalorder 1, %s11
    %p165 = scmp.lt.s32.totalorder %s11, 3
    %p166 = pnand %p164, %p165
    %p167 = pneg %p166
    // Predicated region
    $region9: #{_forward.2} parent=5 // pred_check
      _
    $region10: #{_forward.2} parent=5 // pred_check_branch
      %169 = sbr.rel (%p166) target = $region12
    $region11: #{_forward.2} parent=5 // pred_region
      %s170 = ssub.s32 %s11, 1
      // Predicated region
      $region13: #{_forward.2} parent=11 // pred_check
        %p171 = pneg %p72
      $region14: #{_forward.2} parent=11 // pred_check_branch
        %173 = sbr.rel (%p171) target = $region16
      $region15: #{_forward.2} parent=11 // pred_region
        _
      $region16: #{_forward.2} parent=11 // pred_fallthru
        _
    $region12: #{_forward.2} parent=5 // pred_fallthru
      _
    %p174 = scmp.lt.s32.totalorder %s11, 2
    // Predicated region
    $region17: #{_forward.2} parent=5 // pred_check
      %p175 = pneg %p174
    $region18: #{_forward.2} parent=5 // pred_check_branch
      %177 = sbr.rel (%p175) target = $region20
    $region19: #{_forward.2} parent=5 // pred_region
      // Predicated region
      $region21: #{_forward.2} parent=19 // pred_check
        %p178 = pneg %p45
      $region22: #{_forward.2} parent=19 // pred_check_branch
        %180 = sbr.rel (%p178) target = $region24
      $region23: #{_forward.2} parent=19 // pred_region
        %s181 = smul.u32 4, %s19
        %p182 = scmp.lt.s32.totalorder %s18, 1
        %s183 = scalar_select %p182, %s18, 1
        %p184 = scmp.lt.s32.totalorder %s181, 3
        %s185 = scalar_select %p184, %s181, 3
        %s186 = smul.addr %s183, 16
        %s187 = sadd.s32 %s185, %s186
        %s188 = smul.addr %s187, 8
        %s189 = scalar_lea.vmem %s0, %s188
        %s190 = smul.u32 4, %s19
      $region24: #{_forward.2} parent=19 // pred_fallthru
        _
    $region20: #{_forward.2} parent=5 // pred_fallthru
      _
    %p191 = scmp.le.s32.totalorder 1, %s11
    %p192 = scmp.lt.s32.totalorder %s11, 3
    %p193 = pnand %p191, %p192
    %p194 = pneg %p193
    // Predicated region
    $region25: #{_forward.2} parent=5 // pred_check
      _
    $region26: #{_forward.2} parent=5 // pred_check_branch
      %196 = sbr.rel (%p193) target = $region28
    $region27: #{_forward.2} parent=5 // pred_region
      %s197 = ssub.s32 %s11, 1
      %s198 = smul.u32 4, %s21
      %p199 = scmp.lt.s32.totalorder %s20, 1
      %s200 = scalar_select %p199, %s20, 1
      %p201 = scmp.lt.s32.totalorder %s198, 3
      %s202 = scalar_select %p201, %s198, 3
      %s203 = smul.addr %s200, 16
      %s204 = sadd.s32 %s202, %s203
      %s205 = smul.addr %s204, 8
      %s206 = scalar_lea.vmem %s0, %s205
      %p207 = pneg %p51
      %p208 = pneg %p48
      %p209 = pneg %p72
      %p210 = pneg %p69
      %p211 = pneg %p100
      %p212 = pneg %p97
      %s213 = smul.u32 4, %s21
      %p214 = scmp.lt.s32.totalorder %s20, 1
      %s215 = scalar_select %p214, %s20, 1
      %p216 = scmp.lt.s32.totalorder %s213, 3
      %s217 = scalar_select %p216, %s213, 3
      %s218 = smul.addr %s215, 4
      %s219 = sadd.s32 %s217, %s218
      %s220 = smul.addr %s219, 8
      %s221 = scalar_lea.vmem %s2, %s220
      %p222 = pneg %p128
      %p223 = pneg %p125
      %p224 = scmp.lt.s32.totalorder %s20, 1
      %s225 = scalar_select %p224, %s20, 1
      %p226 = scmp.lt.s32.totalorder %s21, 0
      %s227 = scalar_select %p226, %s21, 0
      %s228 = sadd.s32 %s227, %s225
      %s229 = smul.addr %s228, 8
      %s230 = scalar_lea.vmem %s3, %s229
      %p231 = pneg %p156
      %p232 = pneg %p153
      %p233 = scmp.lt.s32.totalorder %s20, 1
      %s234 = scalar_select %p233, %s20, 1
      %p235 = scmp.lt.s32.totalorder %s21, 0
      %s236 = scalar_select %p235, %s21, 0
      %s237 = sadd.s32 %s236, %s234
      %s238 = smul.addr %s237, 8
      %s239 = scalar_lea.vmem %s4, %s238
      %s240 = smul.u32 4, %s21
      %p241 = scmp.lt.s32.totalorder %s20, 1
      %s242 = scalar_select %p241, %s20, 1
      %p243 = scmp.lt.s32.totalorder %s240, 3
      %s244 = scalar_select %p243, %s240, 3
      %s245 = smul.addr %s242, 16
      %s246 = sadd.s32 %s244, %s245
      %s247 = smul.addr %s246, 8
      %s248 = scalar_lea.vmem %s0, %s247
      %s249 = smul.u32 4, %s21
      %s250 = smul.u32 4, %s21
      %p251 = scmp.lt.s32.totalorder %s20, 1
      %s252 = scalar_select %p251, %s20, 1
      %p253 = scmp.lt.s32.totalorder %s250, 3
      %s254 = scalar_select %p253, %s250, 3
      %s255 = smul.addr %s252, 4
      %s256 = sadd.s32 %s254, %s255
      %s257 = smul.addr %s256, 8
      %s258 = scalar_lea.vmem %s2, %s257
      %s259 = smul.u32 4, %s21
      %p260 = scmp.lt.s32.totalorder %s20, 1
      %s261 = scalar_select %p260, %s20, 1
      %p262 = scmp.lt.s32.totalorder %s21, 0
      %s263 = scalar_select %p262, %s21, 0
      %s264 = sadd.s32 %s263, %s261
      %s265 = smul.addr %s264, 8
      %s266 = scalar_lea.vmem %s3, %s265
      %p267 = scmp.lt.s32.totalorder %s20, 1
      %s268 = scalar_select %p267, %s20, 1
      %p269 = scmp.lt.s32.totalorder %s21, 0
      %s270 = scalar_select %p269, %s21, 0
      %s271 = sadd.s32 %s270, %s268
      %s272 = smul.addr %s271, 8
      %s273 = scalar_lea.vmem %s4, %s272
      %v274 = vld [vmem:[%s1] sm:$0xff]
      %v275 = vld [vmem:[%s248] sm:$0xff]
      %v276 = vld [vmem:[%s248 + $0x8] sm:$0xff]
      %v277 = vld [vmem:[%s248 + $0x10] sm:$0xff]
      %v278 = vld [vmem:[%s248 + $0x18] sm:$0xff]
      %v279 = vld [vmem:[%s248 + $0x20] sm:$0xff]
      %v280 = vld [vmem:[%s248 + $0x28] sm:$0xff]
      %v281 = vld [vmem:[%s248 + $0x30] sm:$0xff]
      %v282 = vld [vmem:[%s248 + $0x38] sm:$0xff]
      %v283 = vld [vmem:[%s248 + $0x40] sm:$0xff]
      %v284 = vld [vmem:[%s248 + $0x48] sm:$0xff]
      %v285 = vld [vmem:[%s248 + $0x50] sm:$0xff]
      %v286 = vld [vmem:[%s248 + $0x58] sm:$0xff]
      %v287 = vld [vmem:[%s248 + $0x60] sm:$0xff]
      %v288 = vld [vmem:[%s248 + $0x68] sm:$0xff]
      %v289 = vld [vmem:[%s248 + $0x70] sm:$0xff]
      %v290 = vld [vmem:[%s248 + $0x78] sm:$0xff]
      %vm291 = vcmask 261120
      %v293 = vsel %vm291, %v274, 0
      %295 = vmatprep.subr.mxu0 0.0
      %296 = vmatpush1.msra.mxu0 0.0
      %297 = vmatprep.subr.mxu0 0.0
      %298 = vmatpush1.msra.mxu0 0.0
      %299 = vmatprep.subr.mxu0 0.0
      %300 = vmatpush1.msra.mxu0 0.0
      %301 = vmatprep.subr.mxu0 0.0
      %302 = vmatpush1.msra.mxu0 0.0
      %303 = vmatprep.subr.mxu0 0.0
      %304 = vmatpush1.msra.mxu0 0.0
      %305 = vmatprep.subr.mxu0 0.0
      %306 = vmatpush1.msra.mxu0 0.0
      %307 = vmatprep.subr.mxu0 0.0
      %308 = vmatpush1.msra.mxu0 0.0
      %309 = vmatprep.subr.mxu0 0.0
      %310 = vmatpush1.msra.mxu0 0.0
      %311 = vmatprep.subr.mxu0 0.0
      %312 = vmatpush1.msra.mxu0 0.0
      %313 = vmatprep.subr.mxu0 0.0
      %314 = vmatpush1.msra.mxu0 0.0
      %315 = vmatprep.subr.mxu0 0.0
      %316 = vmatpush1.msra.mxu0 0.0
      %317 = vmatprep.subr.mxu0 0.0
      %318 = vmatpush1.msra.mxu0 0.0
      %319 = vmatprep.subr.mxu0 %v288
      %320 = vmatpush1.msra.mxu0 %v287
      %321 = vmatprep.subr.mxu0 %v284
      %322 = vmatpush1.msra.mxu0 %v283
      %323 = vmatprep.subr.mxu0 %v280
      %324 = vmatpush1.msra.mxu0 %v279
      %325 = vmatprep.subr.mxu0 %v276
      %326 = vmatpush1.msra.mxu0 %v275
      %327 = vmatprep.subr.mxu0 0.0
      %328 = vmatpush2.msra.mxu0 0.0
      %329 = vmatprep.subr.mxu0 0.0
      %330 = vmatpush2.msra.mxu0 0.0
      %331 = vmatprep.subr.mxu0 0.0
      %332 = vmatpush2.msra.mxu0 0.0
      %333 = vmatprep.subr.mxu0 0.0
      %334 = vmatpush2.msra.mxu0 0.0
      %335 = vmatprep.subr.mxu0 0.0
      %336 = vmatpush2.msra.mxu0 0.0
      %337 = vmatprep.subr.mxu0 0.0
      %338 = vmatpush2.msra.mxu0 0.0
      %339 = vmatprep.subr.mxu0 0.0
      %340 = vmatpush2.msra.mxu0 0.0
      %341 = vmatprep.subr.mxu0 0.0
      %342 = vmatpush2.msra.mxu0 0.0
      %343 = vmatprep.subr.mxu0 0.0
      %344 = vmatpush2.msra.mxu0 0.0
      %345 = vmatprep.subr.mxu0 0.0
      %346 = vmatpush2.msra.mxu0 0.0
      %347 = vmatprep.subr.mxu0 0.0
      %348 = vmatpush2.msra.mxu0 0.0
      %349 = vmatprep.subr.mxu0 0.0
      %350 = vmatpush2.msra.mxu0 0.0
      %351 = vmatprep.subr.mxu0 0.0
      %352 = vmatpush2.msra.mxu0 0.0
      %353 = vmatprep.subr.mxu0 0.0
      %354 = vmatpush2.msra.mxu0 0.0
      %355 = vmatprep.subr.mxu0 0.0
      %356 = vmatpush2.msra.mxu0 0.0
      %357 = vmatprep.subr.mxu0 0.0
      %358 = vmatpush2.msra.mxu0 0.0
      %359 = vmatprep.mubr.f32.mxu0 0.0
      %360 = vmatmul.mubr.f32.gmra.mxu0 %v293
      %v361 = vpop.f32.mrf.mxu0
      %v362 = vadd.f32 0.0, %v361
      %v363 = vpop.f32.mrf.mxu0
      %v364 = vadd.f32 0.0, %v363
      %365 = vdwg.mxu0
      %366 = vmatprep.subr.mxu0 0.0
      %367 = vmatpush1.msra.mxu0 0.0
      %368 = vmatprep.subr.mxu0 0.0
      %369 = vmatpush1.msra.mxu0 0.0
      %370 = vmatprep.subr.mxu0 0.0
      %371 = vmatpush1.msra.mxu0 0.0
      %372 = vmatprep.subr.mxu0 0.0
      %373 = vmatpush1.msra.mxu0 0.0
      %374 = vmatprep.subr.mxu0 0.0
      %375 = vmatpush1.msra.mxu0 0.0
      %376 = vmatprep.subr.mxu0 0.0
      %377 = vmatpush1.msra.mxu0 0.0
      %378 = vmatprep.subr.mxu0 0.0
      %379 = vmatpush1.msra.mxu0 0.0
      %380 = vmatprep.subr.mxu0 0.0
      %381 = vmatpush1.msra.mxu0 0.0
      %382 = vmatprep.subr.mxu0 0.0
      %383 = vmatpush1.msra.mxu0 0.0
      %384 = vmatprep.subr.mxu0 0.0
      %385 = vmatpush1.msra.mxu0 0.0
      %386 = vmatprep.subr.mxu0 0.0
      %387 = vmatpush1.msra.mxu0 0.0
      %388 = vmatprep.subr.mxu0 0.0
      %389 = vmatpush1.msra.mxu0 0.0
      %390 = vmatprep.subr.mxu0 %v290
      %391 = vmatpush1.msra.mxu0 %v289
      %392 = vmatprep.subr.mxu0 %v286
      %393 = vmatpush1.msra.mxu0 %v285
      %394 = vmatprep.subr.mxu0 %v282
      %395 = vmatpush1.msra.mxu0 %v281
      %396 = vmatprep.subr.mxu0 %v278
      %397 = vmatpush1.msra.mxu0 %v277
      %398 = vmatprep.subr.mxu0 0.0
      %399 = vmatpush2.msra.mxu0 0.0
      %400 = vmatprep.subr.mxu0 0.0
      %401 = vmatpush2.msra.mxu0 0.0
      %402 = vmatprep.subr.mxu0 0.0
      %403 = vmatpush2.msra.mxu0 0.0
      %404 = vmatprep.subr.mxu0 0.0
      %405 = vmatpush2.msra.mxu0 0.0
      %406 = vmatprep.subr.mxu0 0.0
      %407 = vmatpush2.msra.mxu0 0.0
      %408 = vmatprep.subr.mxu0 0.0
      %409 = vmatpush2.msra.mxu0 0.0
      %410 = vmatprep.subr.mxu0 0.0
      %411 = vmatpush2.msra.mxu0 0.0
      %412 = vmatprep.subr.mxu0 0.0
      %413 = vmatpush2.msra.mxu0 0.0
      %414 = vmatprep.subr.mxu0 0.0
      %415 = vmatpush2.msra.mxu0 0.0
      %416 = vmatprep.subr.mxu0 0.0
      %417 = vmatpush2.msra.mxu0 0.0
      %418 = vmatprep.subr.mxu0 0.0
      %419 = vmatpush2.msra.mxu0 0.0
      %420 = vmatprep.subr.mxu0 0.0
      %421 = vmatpush2.msra.mxu0 0.0
      %422 = vmatprep.subr.mxu0 0.0
      %423 = vmatpush2.msra.mxu0 0.0
      %424 = vmatprep.subr.mxu0 0.0
      %425 = vmatpush2.msra.mxu0 0.0
      %426 = vmatprep.subr.mxu0 0.0
      %427 = vmatpush2.msra.mxu0 0.0
      %428 = vmatprep.subr.mxu0 0.0
      %429 = vmatpush2.msra.mxu0 0.0
      %430 = vmatprep.mubr.f32.mxu0 0.0
      %431 = vmatmul.mubr.f32.gmra.mxu0 %v293
      %v432 = vpop.f32.mrf.mxu0
      %v433 = vadd.f32 0.0, %v432
      %v434 = vpop.f32.mrf.mxu0
      %v435 = vadd.f32 0.0, %v434
      %436 = vdwg.mxu0
      %437 = vst [vmem:[%s258] sm:$0xff] %v362
      %438 = vst [vmem:[%s258 + $0x8] sm:$0xff] %v364
      %439 = vst [vmem:[%s258 + $0x10] sm:$0xff] %v433
      %440 = vst [vmem:[%s258 + $0x18] sm:$0xff] %v435
      %v441 = vadd.f32 %v362, %v364
      %v442 = vadd.f32 %v441, %v433
      %v443 = vadd.f32 %v442, %v435
      %444 = vadd.xlane.f32.xlu0 %v443
      %v445 = vpop.xlane.xlu0 %444
      %vm446 = vcmask 7168
      %447 = vst.msk [vmem:[%s266] sm:$0xff] %vm446, %v445
      %v448 = vmul.f32 %v362, %v362
      %v449 = vmul.f32 %v364, %v364
      %v450 = vmul.f32 %v433, %v433
      %v451 = vmul.f32 %v435, %v435
      %v452 = vadd.f32 %v448, %v449
      %v453 = vadd.f32 %v452, %v450
      %v454 = vadd.f32 %v453, %v451
      %455 = vadd.xlane.f32.xlu0 %v454
      %v456 = vpop.xlane.xlu0 %455
      %457 = vst.msk [vmem:[%s273] sm:$0xff] %vm446, %v456
      %s458 = smul.u32 4, %s21
      %p459 = scmp.lt.s32.totalorder %s20, 1
      %s460 = scalar_select %p459, %s20, 1
      %p461 = scmp.lt.s32.totalorder %s458, 3
      %s462 = scalar_select %p461, %s458, 3
      %s463 = smul.addr %s460, 4
      %s464 = sadd.s32 %s462, %s463
      %s465 = smul.addr %s464, 8
      %s466 = scalar_lea.vmem %s2, %s465
      %p467 = scmp.lt.s32.totalorder %s20, 1
      %s468 = scalar_select %p467, %s20, 1
      %p469 = scmp.lt.s32.totalorder %s21, 0
      %s470 = scalar_select %p469, %s21, 0
      %s471 = sadd.s32 %s470, %s468
      %s472 = smul.addr %s471, 8
      %s473 = scalar_lea.vmem %s3, %s472
      %p474 = scmp.lt.s32.totalorder %s20, 1
      %s475 = scalar_select %p474, %s20, 1
      %p476 = scmp.lt.s32.totalorder %s21, 0
      %s477 = scalar_select %p476, %s21, 0
      %s478 = sadd.s32 %s477, %s475
      %s479 = smul.addr %s478, 8
      %s480 = scalar_lea.vmem %s4, %s479
      // Predicated region
      $region29: #{_forward.2} parent=27 // pred_check
        %p481 = pneg %p97
      $region30: #{_forward.2} parent=27 // pred_check_branch
        %483 = sbr.rel (%p481) target = $region32
      $region31: #{_forward.2} parent=27 // pred_region
        %s484 = smul.u32 4, %s21
      $region32: #{_forward.2} parent=27 // pred_fallthru
        _
      // Predicated region
      $region33: #{_forward.2} parent=27 // pred_check
        %p485 = pneg %p125
      $region34: #{_forward.2} parent=27 // pred_check_branch
        %487 = sbr.rel (%p485) target = $region36
      $region35: #{_forward.2} parent=27 // pred_region
        _
      $region36: #{_forward.2} parent=27 // pred_fallthru
        _
      // Predicated region
      $region37: #{_forward.2} parent=27 // pred_check
        %p488 = pneg %p153
      $region38: #{_forward.2} parent=27 // pred_check_branch
        %490 = sbr.rel (%p488) target = $region40
      $region39: #{_forward.2} parent=27 // pred_region
        _
      $region40: #{_forward.2} parent=27 // pred_fallthru
        _
    $region28: #{_forward.2} parent=5 // pred_fallthru
      _
    %p491 = scmp.le.s32.totalorder 2, %s11
    // Predicated region
    $region41: #{_forward.2} parent=5 // pred_check
      %p492 = pneg %p491
    $region42: #{_forward.2} parent=5 // pred_check_branch
      %494 = sbr.rel (%p492) target = $region44
    $region43: #{_forward.2} parent=5 // pred_region
      %s495 = ssub.s32 %s11, 2
      // Predicated region
      $region45: #{_forward.2} parent=43 // pred_check
        %p496 = pneg %p103
      $region46: #{_forward.2} parent=43 // pred_check_branch
        %498 = sbr.rel (%p496) target = $region48
      $region47: #{_forward.2} parent=43 // pred_region
        %s499 = smul.u32 4, %s23
        %p500 = scmp.lt.s32.totalorder %s22, 1
        %s501 = scalar_select %p500, %s22, 1
        %p502 = scmp.lt.s32.totalorder %s499, 3
        %s503 = scalar_select %p502, %s499, 3
        %s504 = smul.addr %s501, 4
        %s505 = sadd.s32 %s503, %s504
        %s506 = smul.addr %s505, 8
        %s507 = scalar_lea.vmem %s2, %s506
      $region48: #{_forward.2} parent=43 // pred_fallthru
        _
      // Predicated region
      $region49: #{_forward.2} parent=43 // pred_check
        %p508 = pneg %p131
      $region50: #{_forward.2} parent=43 // pred_check_branch
        %510 = sbr.rel (%p508) target = $region52
      $region51: #{_forward.2} parent=43 // pred_region
        %p511 = scmp.lt.s32.totalorder %s22, 1
        %s512 = scalar_select %p511, %s22, 1
        %p513 = scmp.lt.s32.totalorder %s23, 0
        %s514 = scalar_select %p513, %s23, 0
        %s515 = sadd.s32 %s514, %s512
        %s516 = smul.addr %s515, 8
        %s517 = scalar_lea.vmem %s3, %s516
      $region52: #{_forward.2} parent=43 // pred_fallthru
        _
      // Predicated region
      $region53: #{_forward.2} parent=43 // pred_check
        %p518 = pneg %p159
      $region54: #{_forward.2} parent=43 // pred_check_branch
        %520 = sbr.rel (%p518) target = $region56
      $region55: #{_forward.2} parent=43 // pred_region
        %p521 = scmp.lt.s32.totalorder %s22, 1
        %s522 = scalar_select %p521, %s22, 1
        %p523 = scmp.lt.s32.totalorder %s23, 0
        %s524 = scalar_select %p523, %s23, 0
        %s525 = sadd.s32 %s524, %s522
        %s526 = smul.addr %s525, 8
        %s527 = scalar_lea.vmem %s4, %s526
      $region56: #{_forward.2} parent=43 // pred_fallthru
        _
    $region44: #{_forward.2} parent=5 // pred_fallthru
      _
  $region6: #{_forward.2} parent=0 // loop_footer
    %s15 = sadd.s32 1, %s11
  $region7: #{_forward.2} parent=0 // loop_footer_branch
    %10 = sbr.rel target = $region3
  $region8: #{_forward.2} parent=0 // loop_exit
    _

// kernel: _forward.3
$region0: #{_forward.3}
  #allocation0 [shape = 'u32[]', space=smem, size = 0x4, offset = 0x4, fixed_abs, tag = 'smem constant byte address 0x4 - core index']
  #allocation1 [shape = 'u32[144,128]{1,0:T(1,128)}', space=vmem, size = 0x12000, scoped, tag = 'internal scratch']
  %s0 = inlined_call_operand.vmem [shape: f32[8,1], index: 0, kind: input, shape index: {}]
  %s1 = inlined_call_operand.vmem [shape: f32[8,1], index: 1, kind: input, shape index: {}]
  %s2 = inlined_call_operand.vmem [shape: f32[2,8,512], index: 2, kind: input, shape index: {}, may-alias: {2,3}]
  %s3 = inlined_call_operand.vmem [shape: f32[2,8,512], index: 3, kind: output, shape index: {}, may-alias: {2,3}]
  %s4 = sld [smem:[#allocation0]]
  $region45: #{_forward.3} parent=0
    _
  %s6 = ssub.s32 1, %s4
  %s7 = scalar_select 0, %s6, %s4
  loop: start=0, step=1, limit=4
  $region2: #{_forward.3} parent=0 // loop_pre_header
    _
  $region3: #{_forward.3} parent=0 // loop_header
    %s9 = sphi 0, %s13
    %p10 = scmp.ge.s32.totalorder %s9, 4
    %s16 = sphi 0, %s28
    %s17 = sphi 0, %s24
    %s18 = sphi 0, %s16
    %s19 = sphi 0, %s17
    %s20 = sphi 0, %s18
    %s21 = sphi 0, %s19
    %s29 = sphi 0, %s29
    %s31 = sphi 0, %s29
    %s32 = sphi 0, %s31
    %s46 = sphi 0, %s32
    %s50 = sphi 0, %s50
    %s52 = sphi 0, %s50
    %s53 = sphi 0, %s52
    %s67 = sphi 0, %s53
    %s75 = sphi 0, %s77
    %s78 = sphi 0, %s75
    %s79 = sphi 0, %s78
    %s95 = sphi 0, %s79
    %s103 = sphi 0, %s105
    %s106 = sphi 0, %s103
    %s107 = sphi 0, %s106
    %s123 = sphi 0, %s107
  $region4: #{_forward.3} parent=0 // loop_header_branch
    %12 = sbr.rel (%p10) target = $region8
  $region5: #{_forward.3} parent=0 // loop_body
    %s14 = ssub.s32 %s9, 1
    %s15 = ssub.s32 %s9, 2
    %s22 = sadd.s32 1, %s17
    %p23 = scmp.ge.s32.totalorder %s22, 1
    %s24 = scalar_select %p23, 0, %s22
    %s25 = sadd.s32 1, %s16
    %s26 = scalar_select %p23, %s25, %s16
    %p27 = scmp.ge.s32.totalorder %s26, 2
    %s28 = scalar_select %p27, 0, %s26
    %s30 = sadd.s32 %s29, 1
    %p33 = scmp.eq.s32.totalorder %s9, 1
    %p34 = scmp.ne.s32.totalorder %s29, %s31
    %p35 = scmp.eq.s32.totalorder %s9, 0
    %p36 = por %p34, %p35
    %p37 = scmp.ne.s32.totalorder %s29, %s31
    %p38 = scmp.eq.s32.totalorder %s14, 1
    %p39 = por %p37, %p38
    %p40 = scmp.ne.s32.totalorder %s31, %s32
    %p41 = scmp.eq.s32.totalorder %s14, 0
    %p42 = por %p40, %p41
    %p43 = scmp.ne.s32.totalorder %s31, %s32
    %p44 = scmp.eq.s32.totalorder %s15, 1
    %p45 = por %p43, %p44
    %p47 = scmp.ne.s32.totalorder %s32, %s46
    %p48 = scmp.eq.s32.totalorder %s15, 0
    %p49 = por %p47, %p48
    %s51 = sadd.s32 %s50, 1
    %p54 = scmp.eq.s32.totalorder %s9, 1
    %p55 = scmp.ne.s32.totalorder %s50, %s52
    %p56 = scmp.eq.s32.totalorder %s9, 0
    %p57 = por %p55, %p56
    %p58 = scmp.ne.s32.totalorder %s50, %s52
    %p59 = scmp.eq.s32.totalorder %s14, 1
    %p60 = por %p58, %p59
    %p61 = scmp.ne.s32.totalorder %s52, %s53
    %p62 = scmp.eq.s32.totalorder %s14, 0
    %p63 = por %p61, %p62
    %p64 = scmp.ne.s32.totalorder %s52, %s53
    %p65 = scmp.eq.s32.totalorder %s15, 1
    %p66 = por %p64, %p65
    %p68 = scmp.ne.s32.totalorder %s53, %s67
    %p69 = scmp.eq.s32.totalorder %s15, 0
    %p70 = por %p68, %p69
    %s71 = ssub.s32 %s16, %s28
    %s72 = ssub.s32 %s17, %s24
    %s73 = sor.u32 %s71, %s72
    %p74 = scmp.eq.s32.totalorder %s73, 0
    %s76 = sadd.s32 %s75, 1
    %s77 = scalar_select %p74, %s75, %s76
    %p80 = pneg %p74
    %p81 = scmp.eq.s32.totalorder %s9, 1
    %p82 = por %p80, %p81
    %p83 = scmp.ne.s32.totalorder %s75, %s78
    %p84 = scmp.eq.s32.totalorder %s9, 0
    %p85 = por %p83, %p84
    %p86 = scmp.ne.s32.totalorder %s75, %s78
    %p87 = scmp.eq.s32.totalorder %s14, 1
    %p88 = por %p86, %p87
    %p89 = scmp.ne.s32.totalorder %s78, %s79
    %p90 = scmp.eq.s32.totalorder %s14, 0
    %p91 = por %p89, %p90
    %p92 = scmp.ne.s32.totalorder %s78, %s79
    %p93 = scmp.eq.s32.totalorder %s15, 1
    %p94 = por %p92, %p93
    %p96 = scmp.ne.s32.totalorder %s79, %s95
    %p97 = scmp.eq.s32.totalorder %s15, 0
    %p98 = por %p96, %p97
    %s99 = ssub.s32 %s16, %s28
    %s100 = ssub.s32 %s17, %s24
    %s101 = sor.u32 %s99, %s100
    %p102 = scmp.eq.s32.totalorder %s101, 0
    %s104 = sadd.s32 %s103, 1
    %s105 = scalar_select %p102, %s103, %s104
    %p108 = pneg %p102
    %p109 = scmp.eq.s32.totalorder %s9, 1
    %p110 = por %p108, %p109
    %p111 = scmp.ne.s32.totalorder %s103, %s106
    %p112 = scmp.eq.s32.totalorder %s9, 0
    %p113 = por %p111, %p112
    %p114 = scmp.ne.s32.totalorder %s103, %s106
    %p115 = scmp.eq.s32.totalorder %s14, 1
    %p116 = por %p114, %p115
    %p117 = scmp.ne.s32.totalorder %s106, %s107
    %p118 = scmp.eq.s32.totalorder %s14, 0
    %p119 = por %p117, %p118
    %p120 = scmp.ne.s32.totalorder %s106, %s107
    %p121 = scmp.eq.s32.totalorder %s15, 1
    %p122 = por %p120, %p121
    %p124 = scmp.ne.s32.totalorder %s107, %s123
    %p125 = scmp.eq.s32.totalorder %s15, 0
    %p126 = por %p124, %p125
    %p127 = scmp.le.s32.totalorder 1, %s9
    %p128 = scmp.lt.s32.totalorder %s9, 3
    %p129 = pnand %p127, %p128
    %p130 = pneg %p129
    // Predicated region
    $region9: #{_forward.3} parent=5 // pred_check
      _
    $region10: #{_forward.3} parent=5 // pred_check_branch
      %132 = sbr.rel (%p129) target = $region12
    $region11: #{_forward.3} parent=5 // pred_region
      %s133 = ssub.s32 %s9, 1
      // Predicated region
      $region13: #{_forward.3} parent=11 // pred_check
        %p134 = pneg %p42
      $region14: #{_forward.3} parent=11 // pred_check_branch
        %136 = sbr.rel (%p134) target = $region16
      $region15: #{_forward.3} parent=11 // pred_region
        _
      $region16: #{_forward.3} parent=11 // pred_fallthru
        _
      // Predicated region
      $region17: #{_forward.3} parent=11 // pred_check
        %p137 = pneg %p63
      $region18: #{_forward.3} parent=11 // pred_check_branch
        %139 = sbr.rel (%p137) target = $region20
      $region19: #{_forward.3} parent=11 // pred_region
        _
      $region20: #{_forward.3} parent=11 // pred_fallthru
        _
    $region12: #{_forward.3} parent=5 // pred_fallthru
      _
    %p140 = scmp.lt.s32.totalorder %s9, 2
    // Predicated region
    $region21: #{_forward.3} parent=5 // pred_check
      %p141 = pneg %p140
    $region22: #{_forward.3} parent=5 // pred_check_branch
      %143 = sbr.rel (%p141) target = $region24
    $region23: #{_forward.3} parent=5 // pred_region
      // Predicated region
      $region25: #{_forward.3} parent=23 // pred_check
        %p144 = pneg %p85
      $region26: #{_forward.3} parent=23 // pred_check_branch
        %146 = sbr.rel (%p144) target = $region28
      $region27: #{_forward.3} parent=23 // pred_region
        %s147 = smul.u32 4, %s17
        %p148 = scmp.lt.s32.totalorder %s16, 1
        %s149 = scalar_select %p148, %s16, 1
        %p150 = scmp.lt.s32.totalorder %s147, 3
        %s151 = scalar_select %p150, %s147, 3
        %s152 = smul.addr %s149, 4
        %s153 = sadd.s32 %s151, %s152
        %s154 = smul.addr %s153, 8
        %s155 = scalar_lea.vmem %s2, %s154
        %s156 = smul.u32 4, %s17
      $region28: #{_forward.3} parent=23 // pred_fallthru
        _
    $region24: #{_forward.3} parent=5 // pred_fallthru
      _
    %p157 = scmp.le.s32.totalorder 1, %s9
    %p158 = scmp.lt.s32.totalorder %s9, 3
    %p159 = pnand %p157, %p158
    %p160 = pneg %p159
    // Predicated region
    $region29: #{_forward.3} parent=5 // pred_check
      _
    $region30: #{_forward.3} parent=5 // pred_check_branch
      %162 = sbr.rel (%p159) target = $region32
    $region31: #{_forward.3} parent=5 // pred_region
      %s163 = ssub.s32 %s9, 1
      %p164 = pneg %p42
      %p165 = pneg %p39
      %p166 = pneg %p63
      %p167 = pneg %p60
      %s168 = smul.u32 4, %s19
      %p169 = scmp.lt.s32.totalorder %s18, 1
      %s170 = scalar_select %p169, %s18, 1
      %p171 = scmp.lt.s32.totalorder %s168, 3
      %s172 = scalar_select %p171, %s168, 3
      %s173 = smul.addr %s170, 4
      %s174 = sadd.s32 %s172, %s173
      %s175 = smul.addr %s174, 8
      %s176 = scalar_lea.vmem %s2, %s175
      %p177 = pneg %p91
      %p178 = pneg %p88
      %p179 = pneg %p119
      %p180 = pneg %p116
      %s181 = smul.u32 4, %s19
      %p182 = scmp.lt.s32.totalorder %s18, 1
      %s183 = scalar_select %p182, %s18, 1
      %p184 = scmp.lt.s32.totalorder %s181, 3
      %s185 = scalar_select %p184, %s181, 3
      %s186 = smul.addr %s183, 4
      %s187 = sadd.s32 %s185, %s186
      %s188 = smul.addr %s187, 8
      %s189 = scalar_lea.vmem %s3, %s188
      %s190 = smul.u32 4, %s19
      %p191 = scmp.lt.s32.totalorder %s18, 1
      %s192 = scalar_select %p191, %s18, 1
      %p193 = scmp.lt.s32.totalorder %s190, 3
      %s194 = scalar_select %p193, %s190, 3
      %s195 = smul.addr %s192, 4
      %s196 = sadd.s32 %s194, %s195
      %s197 = smul.addr %s196, 8
      %s198 = scalar_lea.vmem %s2, %s197
      %s199 = smul.u32 4, %s19
      %s200 = smul.u32 4, %s19
      %p201 = scmp.lt.s32.totalorder %s18, 1
      %s202 = scalar_select %p201, %s18, 1
      %p203 = scmp.lt.s32.totalorder %s200, 3
      %s204 = scalar_select %p203, %s200, 3
      %s205 = smul.addr %s202, 4
      %s206 = sadd.s32 %s204, %s205
      %s207 = smul.addr %s206, 8
      %s208 = scalar_lea.vmem %s3, %s207
      %s209 = smul.u32 4, %s19
      %v210 = vld [vmem:[%s198] sm:$0xff]
      %v211 = vld [vmem:[%s198 + $0x8] sm:$0xff]
      %v212 = vld [vmem:[%s198 + $0x10] sm:$0xff]
      %v213 = vld [vmem:[%s198 + $0x18] sm:$0xff]
      %v214 = vld [vmem:[%s0] sm:$0xff]
      %216 = vset.pattern.permute.xlu0 0
      %217 = vperm.xlu0 %216, %v214
      %v218 = vpop.permute.xlu0 %217
      %v220 = vmul.f32 %v210, %v218
      %v221 = vmul.f32 %v211, %v218
      %v222 = vmul.f32 %v212, %v218
      %v223 = vmul.f32 %v213, %v218
      %v224 = vld [vmem:[%s1] sm:$0xff]
      %226 = vset.pattern.permute.xlu0 0
      %227 = vperm.xlu0 %226, %v224
      %v228 = vpop.permute.xlu0 %227
      %v230 = vadd.f32 %v220, %v228
      %v231 = vadd.f32 %v221, %v228
      %v232 = vadd.f32 %v222, %v228
      %v233 = vadd.f32 %v223, %v228
      %v234 = vmax.f32 %v230, 0.0
      %v235 = vmax.f32 %v231, 0.0
      %v236 = vmax.f32 %v232, 0.0
      %v237 = vmax.f32 %v233, 0.0
      %238 = vst [vmem:[%s208] sm:$0xff] %v234
      %239 = vst [vmem:[%s208 + $0x8] sm:$0xff] %v235
      %240 = vst [vmem:[%s208 + $0x10] sm:$0xff] %v236
      %241 = vst [vmem:[%s208 + $0x18] sm:$0xff] %v237
      %s242 = smul.u32 4, %s19
      %p243 = scmp.lt.s32.totalorder %s18, 1
      %s244 = scalar_select %p243, %s18, 1
      %p245 = scmp.lt.s32.totalorder %s242, 3
      %s246 = scalar_select %p245, %s242, 3
      %s247 = smul.addr %s244, 4
      %s248 = sadd.s32 %s246, %s247
      %s249 = smul.addr %s248, 8
      %s250 = scalar_lea.vmem %s3, %s249
      // Predicated region
      $region33: #{_forward.3} parent=31 // pred_check
        %p251 = pneg %p116
      $region34: #{_forward.3} parent=31 // pred_check_branch
        %253 = sbr.rel (%p251) target = $region36
      $region35: #{_forward.3} parent=31 // pred_region
        %s254 = smul.u32 4, %s19
      $region36: #{_forward.3} parent=31 // pred_fallthru
        _
    $region32: #{_forward.3} parent=5 // pred_fallthru
      _
    %p255 = scmp.le.s32.totalorder 2, %s9
    // Predicated region
    $region37: #{_forward.3} parent=5 // pred_check
      %p256 = pneg %p255
    $region38: #{_forward.3} parent=5 // pred_check_branch
      %258 = sbr.rel (%p256) target = $region40
    $region39: #{_forward.3} parent=5 // pred_region
      %s259 = ssub.s32 %s9, 2
      // Predicated region
      $region41: #{_forward.3} parent=39 // pred_check
        %p260 = pneg %p122
      $region42: #{_forward.3} parent=39 // pred_check_branch
        %262 = sbr.rel (%p260) target = $region44
      $region43: #{_forward.3} parent=39 // pred_region
        %s263 = smul.u32 4, %s21
        %p264 = scmp.lt.s32.totalorder %s20, 1
        %s265 = scalar_select %p264, %s20, 1
        %p266 = scmp.lt.s32.totalorder %s263, 3
        %s267 = scalar_select %p266, %s263, 3
        %s268 = smul.addr %s265, 4
        %s269 = sadd.s32 %s267, %s268
        %s270 = smul.addr %s269, 8
        %s271 = scalar_lea.vmem %s3, %s270
      $region44: #{_forward.3} parent=39 // pred_fallthru
        _
    $region40: #{_forward.3} parent=5 // pred_fallthru
      _
  $region6: #{_forward.3} parent=0 // loop_footer
    %s13 = sadd.s32 1, %s9
  $region7: #{_forward.3} parent=0 // loop_footer_branch
    %8 = sbr.rel target = $region3
  $region8: #{_forward.3} parent=0 // loop_exit
    _

</llo_original>
